<compile_context>
chip_gen: v7x
topology: tpu7x:2x2x1
jax: 0.10.0
libtpu: 0.0.40
codegen_flags: <defaults>
</compile_context>

<pallas_src>
import math

import jax
import jax.numpy as jnp
from jax.experimental import pallas as pl
from jax.experimental.pallas import tpu as pltpu


def _round_up(a: int, b: int) -> int:
    return ((a + b - 1) // b) * b


def _largest_tile(total: int, unit: int, max_tile: int) -> int:
    """Largest multiple of `unit` that divides `total` and is <= max_tile."""
    q = max(1, total // unit)
    hi = max(1, min(q, max_tile // unit))
    for d in range(hi, 0, -1):
        if q % d == 0:
            return d * unit
    return unit


def _vmem_capacity_bytes() -> int:
    try:
        return int(pltpu.get_tpu_info().vmem_capacity_bytes)
    except Exception:
        return 64 << 20  # conservative (v7x-sized) fallback


def _mha_linear_kernel(x_ref, w_ref, b_ref, o_ref, acc_ref):
    # x_ref: (tm, tk) bf16; w_ref: (tk, tn) bf16 (pre-transposed in the packer,
    # so the MXU gets the canonical (tm,tk)x(tk,tn) form -> no in-kernel vxpose);
    # b_ref: (1, tn) f32; o_ref: (tm, tn); acc_ref: (tm, tn) f32, resident over K.
    k = pl.program_id(2)

    @pl.when(k == 0)
    def _init():
        # Fold the bias into the accumulator init: removes the epilogue add and
        # collapses the bias / no-bias kernels into one body.
        acc_ref[...] = jnp.broadcast_to(b_ref[...], acc_ref.shape)

    acc_ref[...] += jnp.dot(x_ref[...], w_ref[...],
                            preferred_element_type=jnp.float32)

    @pl.when(k == pl.num_programs(2) - 1)
    def _finalize():
        o_ref[...] = acc_ref[...].astype(o_ref.dtype)


def pack_linear_params(weight, bias, heads, d_k, *, compute_dtype=jnp.bfloat16):
    """One-time (off the hot path) weight prep: transpose -> (K, N), pad to
    128-multiples, cast to compute dtype. Bias padded to (1, Np) f32 (zeros if
    absent)."""
    out_dim, d_model = weight.shape
    assert out_dim == heads * d_k
    Np = _round_up(out_dim, 128)
    Kp = _round_up(d_model, 128)
    w_packed = jnp.pad(weight.T, ((0, Kp - d_model), (0, Np - out_dim))
                       ).astype(compute_dtype)
    if bias is None:
        b_packed = jnp.zeros((1, Np), jnp.float32)
    else:
        b_packed = jnp.pad(bias.astype(jnp.float32), (0, Np - out_dim)
                           ).reshape(1, Np)
    return {
        "w": w_packed, "b": b_packed,
        "heads": heads, "d_k": d_k,
        "d_model": d_model, "out_dim": out_dim,
        "Np": Np, "Kp": Kp,
    }


def prepare_for_mha(x, params, *, tm=512, tn=512, tk=1024, out_dtype=None):
    """PrepareForMultiHeadAttention forward.

    x:       (*lead, d_model)   e.g. (seq, batch, d_model)
    params:  output of pack_linear_params
    returns  (*lead, heads, d_k)
    """
    *lead, d_model = x.shape
    assert d_model == params["d_model"]
    heads, d_k = params["heads"], params["d_k"]
    out_dim, Np, Kp = params["out_dim"], params["Np"], params["Kp"]
    w_packed, b_packed = params["w"], params["b"]

    compute_dtype = w_packed.dtype
    in_bytes = jnp.dtype(compute_dtype).itemsize
    # NOTE: bf16 output would halve writeback; kept at x.dtype for parity with
    # the PyTorch module (numerics decision for the caller).
    out_dtype = x.dtype if out_dtype is None else out_dtype
    out_bytes = jnp.dtype(out_dtype).itemsize

    M = 1
    for s in lead:
        M *= s

    # ---- per-generation VMEM budget ---------------------------------------
    vmem_cap = _vmem_capacity_bytes()
    big_vmem = vmem_cap >= (100 << 20)          # v5e/v6e (128 MiB) vs v7x (64 MiB)
    budget = (96 << 20) if big_vmem else (48 << 20)

    # ---- tile selection ----------------------------------------------------
    # Full-N output blocking when out_dim is moderate: x is then streamed from
    # HBM exactly once (dominant traffic reduction for long-seq projections).
    full_n_cap = 4096 if big_vmem else 2048
    tn_eff = Np if Np <= full_n_cap else _largest_tile(Np, 128, tn)
    tk_eff = _largest_tile(Kp, 128, tk)
    tm_eff = min(tm, _round_up(M, 16))          # 16-row alignment (bf16 sublanes)

    def _need(tm_, tn_, tk_, bufs):
        return (bufs * (tm_ * tk_ + tk_ * tn_) * in_bytes  # buffered input blocks
                + 2 * tm_ * tn_ * out_bytes                 # double-buffered output
                + tm_ * tn_ * 4                             # f32 accumulator
                + 2 * tn_ * 4)                              # bias block

    # Shrink (tk first, then tm, then tn) until the working set fits the budget.
    while _need(tm_eff, tn_eff, tk_eff, 2) + (4 << 20) > budget:
        if tk_eff > 128:
            tk_eff = _largest_tile(Kp, 128, tk_eff // 2)
        elif tm_eff > 16:
            tm_eff = max(16, tm_eff // 2)
        elif tn_eff > 128:
            tn_eff = _largest_tile(Np, 128, tn_eff // 2)
        else:
            break

    Mp = _round_up(M, tm_eff)
    grid_i, grid_j, grid_k = Mp // tm_eff, Np // tn_eff, Kp // tk_eff

    # v7x megacore: make sure the parallel axes expose >= 2 blocks when possible
    # (tiny-M / decode shapes with full-N blocking would otherwise idle one TC).
    if grid_i == 1 and grid_j == 1 and Np >= 256:
        tn_eff = _largest_tile(Np, 128, Np // 2)
        grid_j = Np // tn_eff

    grid = (grid_i, grid_j, grid_k)

    # Deeper prefetch along a long K stream if the extra buffer still fits
    # (hides exposed DMAs, most useful on v5e's lower HBM bandwidth).
    in_bufs = 3 if (grid_k >= 4 and
                    _need(tm_eff, tn_eff, tk_eff, 3) + (4 << 20) <= budget) else 2
    pipe_mode = pl.Buffered(in_bufs) if in_bufs != 2 else None

    def _in_spec(shape, idx_map):
        if pipe_mode is None:
            return pl.BlockSpec(shape, idx_map)
        return pl.BlockSpec(shape, idx_map, pipeline_mode=pipe_mode)

    x_spec = _in_spec((tm_eff, tk_eff), lambda i, j, k: (i, k))
    w_spec = _in_spec((tk_eff, tn_eff), lambda i, j, k: (k, j))
    b_spec = pl.BlockSpec((1, tn_eff), lambda i, j, k: (0, j))
    o_spec = pl.BlockSpec((tm_eff, tn_eff), lambda i, j, k: (i, j))

    x2 = x.reshape(M, d_model)
    # TODO(synk): in production keep x already in compute_dtype / shape-aligned
    # so this pad+cast is a no-op (otherwise it is an extra HBM round trip).
    xp = jnp.pad(x2, ((0, Mp - M), (0, Kp - d_model))).astype(compute_dtype)

    cost = pl.CostEstimate(
        flops=2 * Mp * Np * Kp,
        transcendentals=0,
        bytes_accessed=(grid_j * Mp * Kp * in_bytes     # x re-read per N block
                        + grid_i * Kp * Np * in_bytes   # W re-read per M block
                        + Mp * Np * out_bytes
                        + Np * 4),
    )

    vmem_limit = min(max(_need(tm_eff, tn_eff, tk_eff, in_bufs) + (8 << 20),
                         16 << 20),
                     budget)

    y = pl.pallas_call(
        _mha_linear_kernel,
        out_shape=jax.ShapeDtypeStruct((Mp, Np), out_dtype),
        grid_spec=pltpu.PrefetchScalarGridSpec(
            num_scalar_prefetch=0,
            grid=grid,
            in_specs=[x_spec, w_spec, b_spec],
            out_specs=o_spec,
            scratch_shapes=[pltpu.VMEM((tm_eff, tn_eff), jnp.float32)],
        ),
        compiler_params=pltpu.CompilerParams(
            dimension_semantics=("parallel", "parallel", "arbitrary"),
            vmem_limit_bytes=vmem_limit,
        ),
        cost_estimate=cost,
    )(xp, w_packed, b_packed)

    y = y[:M, :out_dim]
    return y.reshape(*lead, heads, d_k)


def _init_linear_params(key, d_model, out_dim, use_bias):
    # Deterministic init mimicking nn.Linear's default (kaiming-uniform-ish).
    kw, kb = jax.random.split(key)
    limit = 1.0 / math.sqrt(d_model)
    weight = jax.random.uniform(kw, (out_dim, d_model), jnp.float32,
                                minval=-limit, maxval=limit)
    bias = (jax.random.uniform(kb, (out_dim,), jnp.float32,
                               minval=-limit, maxval=limit)
            if use_bias else None)
    return weight, bias


def _reference(x, weight, bias, heads, d_k):
    # Matching numerics: bf16 inputs, f32 accumulation + bias, cast to x.dtype.
    *lead, d_model = x.shape
    M = 1
    for s in lead:
        M *= s
    x2 = x.reshape(M, d_model).astype(jnp.bfloat16)
    ref = jnp.dot(x2, weight.T.astype(jnp.bfloat16),
                  preferred_element_type=jnp.float32)
    if bias is not None:
        ref = ref + bias
    return ref.astype(x.dtype).reshape(*lead, heads, d_k)


if __name__ == "__main__":
    # Small shapes: seq=8, batch=2, d_model=32, heads=4, d_k=8.
    seq, batch, d_model = 8, 2, 32
    heads, d_k = 4, 8

    key = jax.random.PRNGKey(0)
    kx, kp = jax.random.split(key)
    x = jax.random.normal(kx, (seq, batch, d_model), jnp.float32)
    weight, bias = _init_linear_params(kp, d_model, heads * d_k, use_bias=True)

    # With bias.
    packed = pack_linear_params(weight, bias, heads, d_k)
    y = jax.block_until_ready(prepare_for_mha(x, packed))
    ref = _reference(x, weight, bias, heads, d_k)
    assert y.shape == (seq, batch, heads, d_k)
    assert jnp.allclose(y, ref, atol=2e-2, rtol=2e-2), float(jnp.max(jnp.abs(y - ref)))

    # Without bias (same kernel body, zero bias packed in).
    packed_nb = pack_linear_params(weight, None, heads, d_k)
    y_nb = jax.block_until_ready(prepare_for_mha(x, packed_nb))
    ref_nb = _reference(x, weight, None, heads, d_k)
    assert jnp.allclose(y_nb, ref_nb, atol=2e-2, rtol=2e-2), \
        float(jnp.max(jnp.abs(y_nb - ref_nb)))

    print("KERNEL_OK")
</pallas_src>

<mosaic_0001>
module attributes {stable_mosaic.version = 11 : i64} {
  func.func @_mha_linear_kernel(%arg0: i32, %arg1: i32, %arg2: i32, %arg3: memref<16x128xbf16, #tpu.memory_space<vmem>>, %arg4: memref<128x128xbf16, #tpu.memory_space<vmem>>, %arg5: memref<1x128xf32, #tpu.memory_space<vmem>>, %arg6: memref<16x128xf32, #tpu.memory_space<vmem>>, %arg7: memref<16x128xf32, #tpu.memory_space<vmem>>) attributes {dimension_semantics = [#tpu.dimension_semantics<parallel>, #tpu.dimension_semantics<parallel>, #tpu.dimension_semantics<arbitrary>], iteration_bounds = array<i64: 1, 1, 1>, scalar_prefetch = 0 : i64, scratch_operands = 1 : i64, tpu.core_type = #tpu.core_type<tc>, window_params = [{transform_indices = @transform_0, window_bounds = array<i64: 16, 128>}, {transform_indices = @transform_1, window_bounds = array<i64: 128, 128>}, {transform_indices = @transform_2, window_bounds = array<i64: 1, 128>}, {transform_indices = @transform_3, window_bounds = array<i64: 16, 128>}]} {
    %c0_i32 = arith.constant 0 : i32
    %0 = arith.cmpi eq, %arg2, %c0_i32 : i32
    %1 = arith.extui %0 : i1 to i32
    %c0_i32_0 = arith.constant 0 : i32
    %2 = arith.cmpi ne, %1, %c0_i32_0 : i32
    scf.if %2 {
      %c0_10 = arith.constant 0 : index
      %c0_11 = arith.constant 0 : index
      %12 = vector.load %arg5[%c0_10, %c0_11] : memref<1x128xf32, #tpu.memory_space<vmem>>, vector<1x128xf32>
      %13 = vector.shape_cast %12 : vector<1x128xf32> to vector<1x128xf32>
      %14 = vector.broadcast %13 : vector<1x128xf32> to vector<16x128xf32>
      %c0_12 = arith.constant 0 : index
      %c0_13 = arith.constant 0 : index
      %15 = vector.load %arg7[%c0_12, %c0_13] : memref<16x128xf32, #tpu.memory_space<vmem>>, vector<16x128xf32>
      tpu.vector_store %arg7[%c0_12, %c0_13], %14 {strides = array<i32>} : memref<16x128xf32, #tpu.memory_space<vmem>>, vector<16x128xf32>,
    } else {
    }
    %c0 = arith.constant 0 : index
    %c0_1 = arith.constant 0 : index
    %3 = vector.load %arg7[%c0, %c0_1] : memref<16x128xf32, #tpu.memory_space<vmem>>, vector<16x128xf32>
    %c0_2 = arith.constant 0 : index
    %c0_3 = arith.constant 0 : index
    %4 = vector.load %arg3[%c0_2, %c0_3] : memref<16x128xbf16, #tpu.memory_space<vmem>>, vector<16x128xbf16>
    %c0_4 = arith.constant 0 : index
    %c0_5 = arith.constant 0 : index
    %5 = vector.load %arg4[%c0_4, %c0_5] : memref<128x128xbf16, #tpu.memory_space<vmem>>, vector<128x128xbf16>
    %cst = arith.constant dense<0.000000e+00> : vector<16x128xf32>
    %6 = tpu.matmul %4, %5, %cst {dimension_numbers = #tpu.dot_dimension_numbers<[1], [0], [0], [1], [0, 0, 1, 1], [], []>} : vector<16x128xbf16>, vector<128x128xbf16>, vector<16x128xf32> -> vector<16x128xf32>
    %7 = arith.addf %3, %6 : vector<16x128xf32>
    %c0_6 = arith.constant 0 : index
    %c0_7 = arith.constant 0 : index
    %8 = vector.load %arg7[%c0_6, %c0_7] : memref<16x128xf32, #tpu.memory_space<vmem>>, vector<16x128xf32>
    tpu.vector_store %arg7[%c0_6, %c0_7], %7 {strides = array<i32>} : memref<16x128xf32, #tpu.memory_space<vmem>>, vector<16x128xf32>,
    %c0_i32_8 = arith.constant 0 : i32
    %9 = arith.cmpi eq, %arg2, %c0_i32_8 : i32
    %10 = arith.extui %9 : i1 to i32
    %c0_i32_9 = arith.constant 0 : i32
    %11 = arith.cmpi ne, %10, %c0_i32_9 : i32
    scf.if %11 {
      %c0_10 = arith.constant 0 : index
      %c0_11 = arith.constant 0 : index
      %12 = vector.load %arg7[%c0_10, %c0_11] : memref<16x128xf32, #tpu.memory_space<vmem>>, vector<16x128xf32>
      %c0_12 = arith.constant 0 : index
      %c0_13 = arith.constant 0 : index
      %13 = vector.load %arg6[%c0_12, %c0_13] : memref<16x128xf32, #tpu.memory_space<vmem>>, vector<16x128xf32>
      tpu.vector_store %arg6[%c0_12, %c0_13], %12 {strides = array<i32>} : memref<16x128xf32, #tpu.memory_space<vmem>>, vector<16x128xf32>,
    } else {
    }
    return
  }
  func.func @transform_0(%arg0: i32, %arg1: i32, %arg2: i32) -> (i32, i32) {
    %c0_i32 = arith.constant 0 : i32
    return %arg0, %arg2 : i32, i32
  }
  func.func @transform_1(%arg0: i32, %arg1: i32, %arg2: i32) -> (i32, i32) {
    %c0_i32 = arith.constant 0 : i32
    return %arg2, %arg1 : i32, i32
  }
  func.func @transform_2(%arg0: i32, %arg1: i32, %arg2: i32) -> (i32, i32) {
    %c0_i32 = arith.constant 0 : i32
    %c0_i32_0 = arith.constant 0 : i32
    return %c0_i32, %arg1 : i32, i32
  }
  func.func @transform_3(%arg0: i32, %arg1: i32, %arg2: i32) -> (i32, i32) {
    %c0_i32 = arith.constant 0 : i32
    return %arg0, %arg1 : i32, i32
  }
}

</mosaic_0001>

<llo_original>
// kernel: tpu_custom_call.1
$region0: #{tpu_custom_call.1}
  #allocation0 [shape = 'u32[]', space=smem, size = 0x4, offset = 0x4, fixed_abs, tag = 'smem constant byte address 0x4 - core index']
  #allocation1 [shape = 'u32[144,128]{1,0:T(1,128)}', space=vmem, size = 0x12000, scoped, tag = 'internal scratch']
  #allocation2 [shape = 'f32[16,128]{1,0:T(8,128)}', space=vmem, size = 0x2000, scoped, tag = 'scratch operand']
  %s0 = inlined_call_operand.hbm [shape: bf16[16,128], index: 0, kind: input, shape index: {}]
  %s1 = inlined_call_operand.hbm [shape: bf16[128,128], index: 1, kind: input, shape index: {}]
  %s2 = inlined_call_operand.vmem [shape: f32[1,128], index: 2, kind: input, shape index: {}]
  %s3 = inlined_call_operand.hbm [shape: f32[16,128], index: 3, kind: output, shape index: {}]
  %s4 = sld [smem:[#allocation0]]
  $region38: #{tpu_custom_call.1} parent=0
    _
  %s6 = ssub.s32 1, %s4
  %s7 = scalar_select 0, %s6, %s4
  $region1: #{tpu_custom_call.1} parent=0
    #allocation3 [shape = 'u8[4096]{0}', space=vmem, size = 0x1000, scoped, tag = 'input window, operand 0, single buffered']
    #allocation4 [shape = 's32[1]{0}', space=sflag, size = 0x4, scoped, tag = 'scoped memory for tpu_custom_call.1']
    #allocation5 [shape = 's32[1]{0}', space=sflag, size = 0x4, scoped, tag = 'scoped memory for tpu_custom_call.1']
    #allocation6 [shape = 'u8[32768]{0}', space=vmem, size = 0x8000, scoped, tag = 'input window, operand 1, single buffered']
    #allocation7 [shape = 's32[1]{0}', space=sflag, size = 0x4, scoped, tag = 'scoped memory for tpu_custom_call.1']
    #allocation8 [shape = 'u8[8192]{0}', space=vmem, size = 0x2000, scoped, tag = 'output window, operand 0, single buffered']
    %8 = vsyncpa [#allocation4], 0
    %9 = vsyncpa [#allocation7], 0
    %10 = vsyncpa [#allocation5], 0
    // Predicated region
    $region2: #{tpu_custom_call.1} parent=1 // pred_check
      _
    $region3: #{tpu_custom_call.1} parent=1 // pred_check_branch
      %12 = sbr.rel (0) target = $region5
    $region4: #{tpu_custom_call.1} parent=1 // pred_region
      %s14 = ssub.s32 128, 128
      %15 = vsyncadd [#allocation4], %s14
      %s16 = sshll.u32 [#allocation3], 4
      %s17 = int_to_ptr.vmem [resolvable:$true] %s16
      %22 = dma.hbm_to_vmem [thread:$0]  %s0, 128, %s17, [#allocation4], 64, 64, 4
    $region5: #{tpu_custom_call.1} parent=1 // pred_fallthru
      _
    // Predicated region
    $region6: #{tpu_custom_call.1} parent=1 // pred_check
      _
    $region7: #{tpu_custom_call.1} parent=1 // pred_check_branch
      %24 = sbr.rel (0) target = $region9
    $region8: #{tpu_custom_call.1} parent=1 // pred_region
      %s26 = ssub.s32 1024, 1024
      %27 = vsyncadd [#allocation7], %s26
      %s28 = sshll.u32 [#allocation6], 4
      %s29 = int_to_ptr.vmem [resolvable:$true] %s28
      %34 = dma.hbm_to_vmem [thread:$0]  %s1, 1024, %s29, [#allocation7], 64, 64, 4
    $region9: #{tpu_custom_call.1} parent=1 // pred_fallthru
      _
    // Predicated region
    $region10: #{tpu_custom_call.1} parent=1 // pred_check
      _
    $region11: #{tpu_custom_call.1} parent=1 // pred_check_branch
      %36 = sbr.rel (0) target = $region13
    $region12: #{tpu_custom_call.1} parent=1 // pred_region
      _
    $region13: #{tpu_custom_call.1} parent=1 // pred_fallthru
      _
    // Predicated region
    $region14: #{tpu_custom_call.1} parent=1 // pred_check
      _
    $region15: #{tpu_custom_call.1} parent=1 // pred_check_branch
      %38 = sbr.rel (0) target = $region17
    $region16: #{tpu_custom_call.1} parent=1 // pred_region
      %39 = dma.done [#allocation4], 128
    $region17: #{tpu_custom_call.1} parent=1 // pred_fallthru
      _
    // Predicated region
    $region18: #{tpu_custom_call.1} parent=1 // pred_check
      _
    $region19: #{tpu_custom_call.1} parent=1 // pred_check_branch
      %41 = sbr.rel (0) target = $region21
    $region20: #{tpu_custom_call.1} parent=1 // pred_region
      %42 = dma.done [#allocation7], 1024
    $region21: #{tpu_custom_call.1} parent=1 // pred_fallthru
      _
    %p44 = scmp.eq.s32.totalorder 0, 0
    // Predicated region
    $region22: #{tpu_custom_call.1} parent=1 // pred_check
      %p45 = pneg %p44
    $region23: #{tpu_custom_call.1} parent=1 // pred_check_branch
      %47 = sbr.rel (%p45) target = $region25
    $region24: #{tpu_custom_call.1} parent=1 // pred_region
      %v48 = vld [vmem:[%s2] sm:$0x1]
      %v50 = vlaneseq
      %v51 = vshrl.u32 %v50, 7
      %v52 = vsub.s32 0, %v51
      %v53 = vrot.slane %v48, %v52
      %55 = vst [vmem:[#allocation2] sm:$0xff] %v53
      %56 = vst [vmem:[#allocation2 + $0x8] sm:$0xff] %v53
    $region25: #{tpu_custom_call.1} parent=1 // pred_fallthru
      _
    %v57 = vld [vmem:[#allocation2] sm:$0xff]
    %v58 = vld [vmem:[#allocation2 + $0x8] sm:$0xff]
    %v59 = vld [vmem:[#allocation3] sm:$0xf]
    %v60 = vld [vmem:[#allocation3 + $0x4] sm:$0xf]
    %v61 = vld [vmem:[#allocation6] sm:$0xf]
    %v62 = vld [vmem:[#allocation6 + $0x4] sm:$0xf]
    %v63 = vld [vmem:[#allocation6 + $0x8] sm:$0xf]
    %v64 = vld [vmem:[#allocation6 + $0xc] sm:$0xf]
    %v65 = vld [vmem:[#allocation6 + $0x10] sm:$0xf]
    %v66 = vld [vmem:[#allocation6 + $0x14] sm:$0xf]
    %v67 = vld [vmem:[#allocation6 + $0x18] sm:$0xf]
    %v68 = vld [vmem:[#allocation6 + $0x1c] sm:$0xf]
    %v69 = vld [vmem:[#allocation6 + $0x20] sm:$0xf]
    %v70 = vld [vmem:[#allocation6 + $0x24] sm:$0xf]
    %v71 = vld [vmem:[#allocation6 + $0x28] sm:$0xf]
    %v72 = vld [vmem:[#allocation6 + $0x2c] sm:$0xf]
    %v73 = vld [vmem:[#allocation6 + $0x30] sm:$0xf]
    %v74 = vld [vmem:[#allocation6 + $0x34] sm:$0xf]
    %v75 = vld [vmem:[#allocation6 + $0x38] sm:$0xf]
    %v76 = vld [vmem:[#allocation6 + $0x3c] sm:$0xf]
    %v79 = vunpack.c.l.b16 %v59
    %v80 = vunpack.c.l.b16 %v60
    %v81 = vpack.c.b16 %v80, %v79
    %v99 = vunpack.c.l.b16 %v61
    %v100 = vunpack.c.l.b16 %v62
    %v101 = vunpack.c.l.b16 %v63
    %v102 = vunpack.c.l.b16 %v64
    %v103 = vunpack.c.l.b16 %v65
    %v104 = vunpack.c.l.b16 %v66
    %v105 = vunpack.c.l.b16 %v67
    %v106 = vunpack.c.l.b16 %v68
    %v107 = vunpack.c.l.b16 %v69
    %v108 = vunpack.c.l.b16 %v70
    %v109 = vunpack.c.l.b16 %v71
    %v110 = vunpack.c.l.b16 %v72
    %v111 = vunpack.c.l.b16 %v73
    %v112 = vunpack.c.l.b16 %v74
    %v113 = vunpack.c.l.b16 %v75
    %v114 = vunpack.c.l.b16 %v76
    %v115 = vpack.c.b16 %v100, %v99
    %v116 = vpack.c.b16 %v102, %v101
    %v117 = vpack.c.b16 %v104, %v103
    %v118 = vpack.c.b16 %v106, %v105
    %v119 = vpack.c.b16 %v108, %v107
    %v120 = vpack.c.b16 %v110, %v109
    %v121 = vpack.c.b16 %v112, %v111
    %v122 = vpack.c.b16 %v114, %v113
    %131 = vmatprep.subr.bf16.mxu0 0
    %132 = vmatpush1.bf16.msra.mxu0 %v115
    %133 = vmatprep.subr.bf16.mxu0 0
    %134 = vmatpush1.bf16.msra.mxu0 %v116
    %135 = vmatprep.subr.bf16.mxu0 0
    %136 = vmatpush1.bf16.msra.mxu0 %v117
    %137 = vmatprep.subr.bf16.mxu0 0
    %138 = vmatpush1.bf16.msra.mxu0 %v118
    %139 = vmatprep.subr.bf16.mxu0 0
    %140 = vmatpush1.bf16.msra.mxu0 %v119
    %141 = vmatprep.subr.bf16.mxu0 0
    %142 = vmatpush1.bf16.msra.mxu0 %v120
    %143 = vmatprep.subr.bf16.mxu0 0
    %144 = vmatpush1.bf16.msra.mxu0 %v121
    %145 = vmatprep.subr.bf16.mxu0 0
    %146 = vmatpush1.bf16.msra.mxu0 %v122
    %147 = vmatprep.subr.bf16.mxu0 0
    %148 = vmatpush1.bf16.msra.mxu0 0
    %149 = vmatprep.subr.bf16.mxu0 0
    %150 = vmatpush1.bf16.msra.mxu0 0
    %151 = vmatprep.subr.bf16.mxu0 0
    %152 = vmatpush1.bf16.msra.mxu0 0
    %153 = vmatprep.subr.bf16.mxu0 0
    %154 = vmatpush1.bf16.msra.mxu0 0
    %155 = vmatprep.subr.bf16.mxu0 0
    %156 = vmatpush1.bf16.msra.mxu0 0
    %157 = vmatprep.subr.bf16.mxu0 0
    %158 = vmatpush1.bf16.msra.mxu0 0
    %159 = vmatprep.subr.bf16.mxu0 0
    %160 = vmatpush1.bf16.msra.mxu0 0
    %161 = vmatprep.subr.bf16.mxu0 0
    %162 = vmatpush1.bf16.msra.mxu0 0
    %163 = vmatprep.mubr.bf16.mxu0 0
    %164 = vmatmul.mubr.bf16.gmra.mrb[0].mxu0 %v81
    %v165 = vpop.f32.mrb[0].mxu0
    %v166 = vadd.f32 0.0, %v165
    %v167 = vpop.f32.mrb[0].mxu0
    %v168 = vpop.f32.mrb[0].mxu0
    %v169 = vadd.f32 0.0, %v168
    %v170 = vpop.f32.mrb[0].mxu0
    %171 = vdwg.mxu0
    %v172 = vadd.f32 %v57, %v166
    %v173 = vadd.f32 %v58, %v169
    %174 = vst [vmem:[#allocation2] sm:$0xff] %v172
    %175 = vst [vmem:[#allocation2 + $0x8] sm:$0xff] %v173
    // Predicated region
    $region26: #{tpu_custom_call.1} parent=1 // pred_check
      %p176 = pneg %p44
    $region27: #{tpu_custom_call.1} parent=1 // pred_check_branch
      %178 = sbr.rel (%p176) target = $region29
    $region28: #{tpu_custom_call.1} parent=1 // pred_region
      %v179 = vld [vmem:[#allocation2] sm:$0xff]
      %v180 = vld [vmem:[#allocation2 + $0x8] sm:$0xff]
      %181 = vst [vmem:[#allocation8] sm:$0xff] %v179
      %182 = vst [vmem:[#allocation8 + $0x8] sm:$0xff] %v180
    $region29: #{tpu_custom_call.1} parent=1 // pred_fallthru
      _
    // Predicated region
    $region30: #{tpu_custom_call.1} parent=1 // pred_check
      _
    $region31: #{tpu_custom_call.1} parent=1 // pred_check_branch
      %184 = sbr.rel (0) target = $region33
    $region32: #{tpu_custom_call.1} parent=1 // pred_region
      %s186 = ssub.s32 256, 256
      %187 = vsyncadd [#allocation5], %s186
      %s188 = sshll.u32 [#allocation8], 4
      %s189 = int_to_ptr.vmem [resolvable:$true] %s188
      %194 = dma.vmem_to_hbm [thread:$0]  %s189, 256, %s3, [#allocation5], 128, 128, 8
    $region33: #{tpu_custom_call.1} parent=1 // pred_fallthru
      _
    // Predicated region
    $region34: #{tpu_custom_call.1} parent=1 // pred_check
      _
    $region35: #{tpu_custom_call.1} parent=1 // pred_check_branch
      %196 = sbr.rel (0) target = $region37
    $region36: #{tpu_custom_call.1} parent=1 // pred_region
      %197 = dma.done [#allocation5], 256
    $region37: #{tpu_custom_call.1} parent=1 // pred_fallthru
      _
    %198 = vsyncpa [#allocation4], 1
    %199 = vsyncpa [#allocation7], 1
    %200 = vsyncpa [#allocation5], 1

</llo_original>
